<compile_context>
chip_gen: v6e
topology: v6e:2x2x1
jax: 0.10.0
libtpu: 0.0.40
codegen_flags: <defaults>
</compile_context>

<pallas_src>
import functools
from math import sqrt

import jax
import jax.numpy as jnp
from jax import lax
from jax.experimental import pallas as pl
from jax.experimental.pallas import tpu as pltpu

LANE = 128


def _round_up(v, m):
    return ((v + m - 1) // m) * m


def _attention_kernel(n_valid, x_ref, w_ref, b_ref, vs_ref, p_ref):
    """One batch instance per grid step.  All shapes are (8,128)-tile aligned.

    x_ref : (n_pad, F)        zero-padded rows beyond n_valid
    w_ref : (F, 3*d_pad)      fused [V | K | Q], Q pre-scaled by 1/sqrt(d_model)
    b_ref : (1, 3*d_pad)      fused bias, Q-bias pre-scaled
    vs_ref: (n_pad, d_pad)    lane-dense Vs
    p_ref : (n_pad, n_pad)    lane-dense p_attn (padded columns exactly 0)
    """
    d_pad = w_ref.shape[1] // 3

    x = x_ref[...]                                                    # (n_pad, F) f32

    # Fused V|K|Q projection: one (n_pad,F) x (F, 3*d_pad) MXU matmul + bias.
    qkv = jnp.dot(x, w_ref[...], preferred_element_type=jnp.float32) + b_ref[...]
    value = qkv[:, 0 * d_pad:1 * d_pad]          # 128-aligned slices (free)
    key   = qkv[:, 1 * d_pad:2 * d_pad]
    query = qkv[:, 2 * d_pad:3 * d_pad]          # already pre-scaled by 1/sqrt(d_model)

    # scores = Q_scaled @ K^T without an explicit transpose (contract feature axes).
    scores = lax.dot_general(
        query, key,
        dimension_numbers=(((1,), (1,)), ((), ())),
        preferred_element_type=jnp.float32)                           # (n_pad, n_pad)

    # Mask padded key columns so softmax assigns them exactly 0 weight.
    col = lax.broadcasted_iota(jnp.int32, scores.shape, 1)
    scores = jnp.where(col < n_valid, scores, jnp.float32(-1e30))

    # Numerically stable softmax; reciprocal on the EUP (approx) + one Newton step.
    m = jnp.max(scores, axis=-1, keepdims=True)
    e = jnp.exp(scores - m)                      # exp(-1e30 - m) underflows to exactly 0
    s = jnp.sum(e, axis=-1, keepdims=True)
    r = pl.reciprocal(s, approx=True)
    r = r * (2.0 - s * r)                        # Newton refinement -> full f32 accuracy
    p_attn = e * r                               # (n_pad, n_pad), lane-dense

    # Vs = p_attn @ V; padded value rows carry only the bias but get exactly 0 weight.
    vs = jnp.dot(p_attn, value, preferred_element_type=jnp.float32)   # (n_pad, d_pad)

    vs_ref[...] = vs
    p_ref[...] = p_attn


def prepare_params(params, d_model):
    """One-time packing of torch-layout weights into the fused, padded, pre-scaled layout.

    Runs once at init (NOT per forward call): transposes (out,in)->(in,out),
    zero-pads each head to a 128-lane block, folds 1/sqrt(d_model) into Q,
    and concatenates [V | K | Q] into a single weight / bias pair.
    """
    input_size = params["V_w"].shape[1]
    d_pad = max(LANE, _round_up(d_model, LANE))
    scale = 1.0 / sqrt(float(d_model))

    def pack(w, b, s):
        w_t = w.T * s                                            # (F, d_model)
        b_t = b.reshape(1, d_model) * s
        w_p = jnp.zeros((input_size, d_pad), jnp.float32).at[:, :d_model].set(w_t)
        b_p = jnp.zeros((1, d_pad), jnp.float32).at[:, :d_model].set(b_t)
        return w_p, b_p

    wv, bv = pack(params["V_w"], params["V_b"], 1.0)
    wk, bk = pack(params["K_w"], params["K_b"], 1.0)
    wq, bq = pack(params["Q_w"], params["Q_b"], scale)           # fold softmax scale into Q
    w_fused = jnp.concatenate([wv, wk, wq], axis=1)              # (F, 3*d_pad)
    b_fused = jnp.concatenate([bv, bk, bq], axis=1)              # (1, 3*d_pad)
    return w_fused, b_fused


@functools.partial(jax.jit, static_argnames=("d_model",))
def attention_forward_batched(xb, w_fused, b_fused, d_model):
    """xb: (B, N, input_size) f32 -> (Vs (B,N,d_model), p_attn (B,N,N)).

    One pallas_call with grid=(B,): weights/bias use constant index_maps (DMA'd
    once, VMEM-resident across iterations); the batch axis is "parallel" so the
    two v7x TensorCores split it.
    """
    B, N, F = xb.shape
    d_pad = w_fused.shape[1] // 3
    n_pad = max(LANE, _round_up(N, LANE))

    # Zero-pad rows outside the kernel (fuses into the surrounding jit graph);
    # everything inside the kernel is then (8,128)-tile aligned and lane-dense.
    xp = jnp.pad(xb, ((0, 0), (0, n_pad - N), (0, 0)))

    kernel = functools.partial(_attention_kernel, N)

    cost = pl.CostEstimate(
        flops=B * (2 * n_pad * F * 3 * d_pad + 2 * n_pad * n_pad * d_pad * 2),
        transcendentals=B * (n_pad * n_pad + n_pad),
        bytes_accessed=4 * (B * n_pad * F + F * 3 * d_pad + 3 * d_pad
                            + B * n_pad * d_pad + B * n_pad * n_pad),
    )

    vs_pad, p_pad = pl.pallas_call(
        kernel,
        out_shape=(
            jax.ShapeDtypeStruct((B, n_pad, d_pad), jnp.float32),   # lane-dense Vs
            jax.ShapeDtypeStruct((B, n_pad, n_pad), jnp.float32),   # lane-dense p_attn
        ),
        grid=(B,),
        in_specs=[
            pl.BlockSpec((None, n_pad, F), lambda b: (b, 0, 0)),    # per-instance x
            pl.BlockSpec((F, 3 * d_pad), lambda b: (0, 0)),         # weights: constant block
            pl.BlockSpec((1, 3 * d_pad), lambda b: (0, 0)),         # bias:    constant block
        ],
        out_specs=(
            pl.BlockSpec((None, n_pad, d_pad), lambda b: (b, 0, 0)),
            pl.BlockSpec((None, n_pad, n_pad), lambda b: (b, 0, 0)),
        ),
        compiler_params=pltpu.CompilerParams(
            dimension_semantics=("parallel",)),
        cost_estimate=cost,
    )(xp, w_fused, b_fused)

    # Slices fuse into the surrounding jit graph; kernel-side stores stay lane-dense.
    # TODO(synk): for N >> 128 switch to a (query-tile x kv-tile) grid with
    # flash-style online softmax (tiles >=256 on v6e/v7x, sized for 64 MiB VMEM
    # on v7x) and bf16 Q/K/P operands, instead of materializing (n_pad, n_pad).
    return vs_pad[:, :N, :d_model], p_pad[:, :N, :N]


def attention_forward(x, w_fused, b_fused, d_model):
    """Single-instance forward matching the PyTorch module: x (N, input_size)."""
    vs, p_attn = attention_forward_batched(x[None], w_fused, b_fused, d_model)
    return vs[0], p_attn[0]


def init_params(key, input_size, d_model):
    """Deterministic init mimicking torch.nn.Linear default (U[-1/sqrt(fan_in), +])."""
    ks = jax.random.split(key, 6)
    bound = 1.0 / sqrt(float(input_size))
    u = lambda k, shape: jax.random.uniform(k, shape, jnp.float32, -bound, bound)
    return {
        "V_w": u(ks[0], (d_model, input_size)), "V_b": u(ks[1], (d_model,)),
        "Q_w": u(ks[2], (d_model, input_size)), "Q_b": u(ks[3], (d_model,)),
        "K_w": u(ks[4], (d_model, input_size)), "K_b": u(ks[5], (d_model,)),
    }


def reference_forward(x, params, d_model):
    """Pure-JAX reference matching the PyTorch forward exactly (torch-layout params)."""
    value = x @ params["V_w"].T + params["V_b"]
    key   = x @ params["K_w"].T + params["K_b"]
    query = x @ params["Q_w"].T + params["Q_b"]
    scores = (query @ key.T) / sqrt(float(d_model))
    p_attn = jax.nn.softmax(scores, axis=-1)
    return p_attn @ value, p_attn


if __name__ == "__main__":
    N = 8            # number of "nodes" / sequence rows
    input_size = 32
    d_model = 32

    root = jax.random.PRNGKey(0)
    k_param, k_x, k_adj, k_xb = jax.random.split(root, 4)

    params = init_params(k_param, input_size, d_model)
    x = jax.random.normal(k_x, (N, input_size), jnp.float32)
    adj = jax.random.normal(k_adj, (N, N), jnp.float32)  # unused by the forward (matches PyTorch)

    # One-time packing (off the per-call path).
    w_fused, b_fused = prepare_params(params, d_model)
    jax.block_until_ready((w_fused, b_fused))

    # Single-instance forward (the module's semantics).
    vs, p_attn = attention_forward(x, w_fused, b_fused, d_model)
    jax.block_until_ready((vs, p_attn))

    vs_ref, p_ref = reference_forward(x, params, d_model)
    assert vs.shape == (N, d_model) and p_attn.shape == (N, N)
    assert jnp.allclose(vs, vs_ref, atol=1e-5, rtol=1e-5)
    assert jnp.allclose(p_attn, p_ref, atol=1e-5, rtol=1e-5)

    # Batched path: many module invocations fused into one pallas_call (grid=(B,),
    # weights VMEM-resident, batch axis parallel across v7x's two TensorCores).
    B = 4
    xb = jax.random.normal(k_xb, (B, N, input_size), jnp.float32)
    vsb, pb = attention_forward_batched(xb, w_fused, b_fused, d_model)
    jax.block_until_ready((vsb, pb))
    for i in range(B):
        vs_r, p_r = reference_forward(xb[i], params, d_model)
        assert jnp.allclose(vsb[i], vs_r, atol=1e-5, rtol=1e-5)
        assert jnp.allclose(pb[i], p_r, atol=1e-5, rtol=1e-5)

    print("KERNEL_OK")
</pallas_src>

<mosaic_0001>
module attributes {stable_mosaic.version = 11 : i64} {
  func.func @_attention_kernel(%arg0: i32, %arg1: memref<1x128x32xf32, #tpu.memory_space<vmem>>, %arg2: memref<32x384xf32, #tpu.memory_space<vmem>>, %arg3: memref<1x384xf32, #tpu.memory_space<vmem>>, %arg4: memref<1x128x128xf32, #tpu.memory_space<vmem>>, %arg5: memref<1x128x128xf32, #tpu.memory_space<vmem>>) attributes {dimension_semantics = [#tpu.dimension_semantics<parallel>], iteration_bounds = array<i64: 1>, scalar_prefetch = 0 : i64, scratch_operands = 0 : i64, tpu.core_type = #tpu.core_type<tc>, window_params = [{transform_indices = @transform_0, window_bounds = array<i64: 1, 128, 32>}, {pipeline_mode = #tpu.pipeline_mode<synchronous>, transform_indices = @transform_1, window_bounds = array<i64: 32, 384>}, {pipeline_mode = #tpu.pipeline_mode<synchronous>, transform_indices = @transform_2, window_bounds = array<i64: 1, 384>}, {transform_indices = @transform_3, window_bounds = array<i64: 1, 128, 128>}, {transform_indices = @transform_4, window_bounds = array<i64: 1, 128, 128>}]} {
    %c0 = arith.constant 0 : index
    %c0_0 = arith.constant 0 : index
    %c0_1 = arith.constant 0 : index
    %0 = vector.load %arg1[%c0, %c0_0, %c0_1] : memref<1x128x32xf32, #tpu.memory_space<vmem>>, vector<1x128x32xf32>
    %1 = vector.shape_cast %0 : vector<1x128x32xf32> to vector<128x32xf32>
    %c0_2 = arith.constant 0 : index
    %c0_3 = arith.constant 0 : index
    %2 = vector.load %arg2[%c0_2, %c0_3] : memref<32x384xf32, #tpu.memory_space<vmem>>, vector<32x384xf32>
    %cst = arith.constant dense<0.000000e+00> : vector<128x384xf32>
    %3 = tpu.matmul %1, %2, %cst {dimension_numbers = #tpu.dot_dimension_numbers<[1], [0], [0], [1], [0, 0, 1, 1], [], []>} : vector<128x32xf32>, vector<32x384xf32>, vector<128x384xf32> -> vector<128x384xf32>
    %c0_4 = arith.constant 0 : index
    %c0_5 = arith.constant 0 : index
    %4 = vector.load %arg3[%c0_4, %c0_5] : memref<1x384xf32, #tpu.memory_space<vmem>>, vector<1x384xf32>
    %5 = vector.broadcast %4 : vector<1x384xf32> to vector<128x384xf32>
    %6 = arith.addf %3, %5 : vector<128x384xf32>
    %7 = vector.extract_strided_slice %6 {offsets = [0, 0], sizes = [128, 128], strides = [1, 1]} : vector<128x384xf32> to vector<128x128xf32>
    %8 = vector.extract_strided_slice %6 {offsets = [0, 128], sizes = [128, 128], strides = [1, 1]} : vector<128x384xf32> to vector<128x128xf32>
    %9 = vector.extract_strided_slice %6 {offsets = [0, 256], sizes = [128, 128], strides = [1, 1]} : vector<128x384xf32> to vector<128x128xf32>
    %cst_6 = arith.constant dense<0.000000e+00> : vector<128x128xf32>
    %10 = tpu.matmul %9, %8, %cst_6 {dimension_numbers = #tpu.dot_dimension_numbers<[1], [1], [0], [0], [0, 0, 1, 0], [], []>} : vector<128x128xf32>, vector<128x128xf32>, vector<128x128xf32> -> vector<128x128xf32>
    %11 = tpu.iota {dimensions = array<i32: 1>} : vector<128x128xi32>
    %c8_i32 = arith.constant 8 : i32
    %12 = vector.broadcast %c8_i32 : i32 to vector<128x128xi32>
    %13 = arith.cmpi slt, %11, %12 : vector<128x128xi32>
    %cst_7 = arith.constant -1.000000e+30 : f32
    %14 = vector.broadcast %cst_7 : f32 to vector<128x128xf32>
    %15 = arith.select %13, %10, %14 : vector<128x128xi1>, vector<128x128xf32>
    %cst_8 = arith.constant dense<0xFF800000> : vector<128xf32>
    %16 = vector.multi_reduction <maximumf>, %15, %cst_8 [1] : vector<128x128xf32> to vector<128xf32>
    %17 = vector.shape_cast %16 : vector<128xf32> to vector<128x1xf32>
    %18 = vector.broadcast %17 : vector<128x1xf32> to vector<128x128xf32>
    %19 = arith.subf %15, %18 : vector<128x128xf32>
    %20 = math.exp %19 : vector<128x128xf32>
    %cst_9 = arith.constant dense<0.000000e+00> : vector<128xf32>
    %21 = vector.multi_reduction <add>, %20, %cst_9 [1] : vector<128x128xf32> to vector<128xf32>
    %22 = vector.shape_cast %21 : vector<128xf32> to vector<128x1xf32>
    %23 = tpu.reciprocal %22 {approx = true} : vector<128x1xf32> -> vector<128x1xf32>
    %24 = arith.mulf %22, %23 : vector<128x1xf32>
    %cst_10 = arith.constant 2.000000e+00 : f32
    %25 = vector.broadcast %cst_10 : f32 to vector<128x1xf32>
    %26 = arith.subf %25, %24 : vector<128x1xf32>
    %27 = arith.mulf %23, %26 : vector<128x1xf32>
    %28 = vector.broadcast %27 : vector<128x1xf32> to vector<128x128xf32>
    %29 = arith.mulf %20, %28 : vector<128x128xf32>
    %cst_11 = arith.constant dense<0.000000e+00> : vector<128x128xf32>
    %30 = tpu.matmul %29, %7, %cst_11 {dimension_numbers = #tpu.dot_dimension_numbers<[1], [0], [0], [1], [0, 0, 1, 1], [], []>} : vector<128x128xf32>, vector<128x128xf32>, vector<128x128xf32> -> vector<128x128xf32>
    %c0_12 = arith.constant 0 : index
    %c0_13 = arith.constant 0 : index
    %c0_14 = arith.constant 0 : index
    %31 = vector.load %arg4[%c0_12, %c0_13, %c0_14] : memref<1x128x128xf32, #tpu.memory_space<vmem>>, vector<1x128x128xf32>
    %32 = vector.shape_cast %31 : vector<1x128x128xf32> to vector<128x128xf32>
    %33 = vector.shape_cast %30 : vector<128x128xf32> to vector<1x128x128xf32>
    tpu.vector_store %arg4[%c0_12, %c0_13, %c0_14], %33 {strides = array<i32>} : memref<1x128x128xf32, #tpu.memory_space<vmem>>, vector<1x128x128xf32>,
    %c0_15 = arith.constant 0 : index
    %c0_16 = arith.constant 0 : index
    %c0_17 = arith.constant 0 : index
    %34 = vector.load %arg5[%c0_15, %c0_16, %c0_17] : memref<1x128x128xf32, #tpu.memory_space<vmem>>, vector<1x128x128xf32>
    %35 = vector.shape_cast %34 : vector<1x128x128xf32> to vector<128x128xf32>
    %36 = vector.shape_cast %29 : vector<128x128xf32> to vector<1x128x128xf32>
    tpu.vector_store %arg5[%c0_15, %c0_16, %c0_17], %36 {strides = array<i32>} : memref<1x128x128xf32, #tpu.memory_space<vmem>>, vector<1x128x128xf32>,
    return
  }
  func.func @transform_0(%arg0: i32) -> (i32, i32, i32) {
    %c0_i32 = arith.constant 0 : i32
    %c0_i32_0 = arith.constant 0 : i32
    %c0_i32_1 = arith.constant 0 : i32
    return %arg0, %c0_i32, %c0_i32_0 : i32, i32, i32
  }
  func.func @transform_1(%arg0: i32) -> (i32, i32) {
    %c0_i32 = arith.constant 0 : i32
    %c0_i32_0 = arith.constant 0 : i32
    %c0_i32_1 = arith.constant 0 : i32
    return %c0_i32, %c0_i32_0 : i32, i32
  }
  func.func @transform_2(%arg0: i32) -> (i32, i32) {
    %c0_i32 = arith.constant 0 : i32
    %c0_i32_0 = arith.constant 0 : i32
    %c0_i32_1 = arith.constant 0 : i32
    return %c0_i32, %c0_i32_0 : i32, i32
  }
  func.func @transform_3(%arg0: i32) -> (i32, i32, i32) {
    %c0_i32 = arith.constant 0 : i32
    %c0_i32_0 = arith.constant 0 : i32
    %c0_i32_1 = arith.constant 0 : i32
    return %arg0, %c0_i32, %c0_i32_0 : i32, i32, i32
  }
  func.func @transform_4(%arg0: i32) -> (i32, i32, i32) {
    %c0_i32 = arith.constant 0 : i32
    %c0_i32_0 = arith.constant 0 : i32
    %c0_i32_1 = arith.constant 0 : i32
    return %arg0, %c0_i32, %c0_i32_0 : i32, i32, i32
  }
}

</mosaic_0001>

<llo_original>
// kernel: attention_forward_batched.1
$region0: #{attention_forward_batched.1}
  #allocation0 [shape = 'u32[]', space=smem, size = 0x4, offset = 0x4, fixed_abs, tag = 'smem constant byte address 0x4 - core index']
  #allocation1 [shape = 'u32[144,128]{1,0:T(1,128)}', space=vmem, size = 0x12000, scoped, tag = 'internal scratch']
  %s0 = inlined_call_operand.vmem [shape: f32[1,128,32], index: 0, kind: input, shape index: {}]
  %s1 = inlined_call_operand.vmem [shape: f32[32,384], index: 1, kind: input, shape index: {}]
  %s2 = inlined_call_operand.vmem [shape: f32[1,384], index: 2, kind: input, shape index: {}]
  %s3 = inlined_call_operand.vmem [shape: f32[1,128,128], index: 3, kind: output, shape index: {0}]
  %s4 = inlined_call_operand.vmem [shape: f32[1,128,128], index: 4, kind: output, shape index: {1}]
  %5 = xla_tuple %s3, %s4
  %s6 = sld [smem:[#allocation0]]
  $region30: #{attention_forward_batched.1} parent=0
    _
  %s8 = ssub.s32 1, %s6
  %s9 = scalar_select 0, %s8, %s6
  // Predicated region
  $region2: #{attention_forward_batched.1} parent=0 // pred_check
    _
  $region3: #{attention_forward_batched.1} parent=0 // pred_check_branch
    %11 = sbr.rel (0) target = $region5
  $region4: #{attention_forward_batched.1} parent=0 // pred_region
    _
  $region5: #{attention_forward_batched.1} parent=0 // pred_fallthru
    _
  // Predicated region
  $region6: #{attention_forward_batched.1} parent=0 // pred_check
    _
  $region7: #{attention_forward_batched.1} parent=0 // pred_check_branch
    %13 = sbr.rel (0) target = $region9
  $region8: #{attention_forward_batched.1} parent=0 // pred_region
    _
  $region9: #{attention_forward_batched.1} parent=0 // pred_fallthru
    _
  // Predicated region
  $region10: #{attention_forward_batched.1} parent=0 // pred_check
    _
  $region11: #{attention_forward_batched.1} parent=0 // pred_check_branch
    %15 = sbr.rel (0) target = $region13
  $region12: #{attention_forward_batched.1} parent=0 // pred_region
    _
  $region13: #{attention_forward_batched.1} parent=0 // pred_fallthru
    _
  %v16 = vld [vmem:[%s0] sm:$0xff]
  %v17 = vld [vmem:[%s0 + $0x8] sm:$0xff]
  %v18 = vld [vmem:[%s0 + $0x10] sm:$0xff]
  %v19 = vld [vmem:[%s0 + $0x18] sm:$0xff]
  %v20 = vld [vmem:[%s0 + $0x20] sm:$0xff]
  %v21 = vld [vmem:[%s0 + $0x28] sm:$0xff]
  %v22 = vld [vmem:[%s0 + $0x30] sm:$0xff]
  %v23 = vld [vmem:[%s0 + $0x38] sm:$0xff]
  %v24 = vld [vmem:[%s0 + $0x40] sm:$0xff]
  %v25 = vld [vmem:[%s0 + $0x48] sm:$0xff]
  %v26 = vld [vmem:[%s0 + $0x50] sm:$0xff]
  %v27 = vld [vmem:[%s0 + $0x58] sm:$0xff]
  %v28 = vld [vmem:[%s0 + $0x60] sm:$0xff]
  %v29 = vld [vmem:[%s0 + $0x68] sm:$0xff]
  %v30 = vld [vmem:[%s0 + $0x70] sm:$0xff]
  %v31 = vld [vmem:[%s0 + $0x78] sm:$0xff]
  %v32 = vld [vmem:[%s1] sm:$0xff]
  %v33 = vld [vmem:[%s1 + $0x8] sm:$0xff]
  %v34 = vld [vmem:[%s1 + $0x10] sm:$0xff]
  %v35 = vld [vmem:[%s1 + $0x18] sm:$0xff]
  %v36 = vld [vmem:[%s1 + $0x20] sm:$0xff]
  %v37 = vld [vmem:[%s1 + $0x28] sm:$0xff]
  %v38 = vld [vmem:[%s1 + $0x30] sm:$0xff]
  %v39 = vld [vmem:[%s1 + $0x38] sm:$0xff]
  %v40 = vld [vmem:[%s1 + $0x40] sm:$0xff]
  %v41 = vld [vmem:[%s1 + $0x48] sm:$0xff]
  %v42 = vld [vmem:[%s1 + $0x50] sm:$0xff]
  %v43 = vld [vmem:[%s1 + $0x58] sm:$0xff]
  %v44 = vld [vmem:[%s2] sm:$0x7]
  %v46 = vlaneseq
  %v47 = vshrl.u32 %v46, 7
  %v48 = vsub.s32 0, %v47
  %v49 = vrot.slane %v44, %v48
  %v50 = vlaneseq
  %v51 = vshrl.u32 %v50, 7
  %v52 = vsub.s32 1, %v51
  %v53 = vrot.slane %v44, %v52
  %v54 = vlaneseq
  %v55 = vshrl.u32 %v54, 7
  %v56 = vsub.s32 2, %v55
  %v57 = vrot.slane %v44, %v56
  %vm61 = vcmask 261120
  %v63 = vsel %vm61, %v16, 0
  %v66 = vsel %vm61, %v17, 0
  %v69 = vsel %vm61, %v18, 0
  %v72 = vsel %vm61, %v19, 0
  %v75 = vsel %vm61, %v20, 0
  %v78 = vsel %vm61, %v21, 0
  %v81 = vsel %vm61, %v22, 0
  %v84 = vsel %vm61, %v23, 0
  %v87 = vsel %vm61, %v24, 0
  %v90 = vsel %vm61, %v25, 0
  %v93 = vsel %vm61, %v26, 0
  %v96 = vsel %vm61, %v27, 0
  %v99 = vsel %vm61, %v28, 0
  %v102 = vsel %vm61, %v29, 0
  %v105 = vsel %vm61, %v30, 0
  %v108 = vsel %vm61, %v31, 0
  %110 = vmatprep.subr.mxu0 0.0
  %111 = vmatpush1.msra.mxu0 0.0
  %112 = vmatprep.subr.mxu0 0.0
  %113 = vmatpush1.msra.mxu0 0.0
  %114 = vmatprep.subr.mxu0 0.0
  %115 = vmatpush1.msra.mxu0 0.0
  %116 = vmatprep.subr.mxu0 0.0
  %117 = vmatpush1.msra.mxu0 0.0
  %118 = vmatprep.subr.mxu0 0.0
  %119 = vmatpush1.msra.mxu0 0.0
  %120 = vmatprep.subr.mxu0 0.0
  %121 = vmatpush1.msra.mxu0 0.0
  %122 = vmatprep.subr.mxu0 0.0
  %123 = vmatpush1.msra.mxu0 0.0
  %124 = vmatprep.subr.mxu0 0.0
  %125 = vmatpush1.msra.mxu0 0.0
  %126 = vmatprep.subr.mxu0 0.0
  %127 = vmatpush1.msra.mxu0 0.0
  %128 = vmatprep.subr.mxu0 0.0
  %129 = vmatpush1.msra.mxu0 0.0
  %130 = vmatprep.subr.mxu0 0.0
  %131 = vmatpush1.msra.mxu0 0.0
  %132 = vmatprep.subr.mxu0 0.0
  %133 = vmatpush1.msra.mxu0 0.0
  %134 = vmatprep.subr.mxu0 %v42
  %135 = vmatpush1.msra.mxu0 %v41
  %136 = vmatprep.subr.mxu0 %v39
  %137 = vmatpush1.msra.mxu0 %v38
  %138 = vmatprep.subr.mxu0 %v36
  %139 = vmatpush1.msra.mxu0 %v35
  %140 = vmatprep.subr.mxu0 %v33
  %141 = vmatpush1.msra.mxu0 %v32
  %142 = vmatprep.subr.mxu0 0.0
  %143 = vmatpush2.msra.mxu0 0.0
  %144 = vmatprep.subr.mxu0 0.0
  %145 = vmatpush2.msra.mxu0 0.0
  %146 = vmatprep.subr.mxu0 0.0
  %147 = vmatpush2.msra.mxu0 0.0
  %148 = vmatprep.subr.mxu0 0.0
  %149 = vmatpush2.msra.mxu0 0.0
  %150 = vmatprep.subr.mxu0 0.0
  %151 = vmatpush2.msra.mxu0 0.0
  %152 = vmatprep.subr.mxu0 0.0
  %153 = vmatpush2.msra.mxu0 0.0
  %154 = vmatprep.subr.mxu0 0.0
  %155 = vmatpush2.msra.mxu0 0.0
  %156 = vmatprep.subr.mxu0 0.0
  %157 = vmatpush2.msra.mxu0 0.0
  %158 = vmatprep.subr.mxu0 0.0
  %159 = vmatpush2.msra.mxu0 0.0
  %160 = vmatprep.subr.mxu0 0.0
  %161 = vmatpush2.msra.mxu0 0.0
  %162 = vmatprep.subr.mxu0 0.0
  %163 = vmatpush2.msra.mxu0 0.0
  %164 = vmatprep.subr.mxu0 0.0
  %165 = vmatpush2.msra.mxu0 0.0
  %166 = vmatprep.subr.mxu0 0.0
  %167 = vmatpush2.msra.mxu0 0.0
  %168 = vmatprep.subr.mxu0 0.0
  %169 = vmatpush2.msra.mxu0 0.0
  %170 = vmatprep.subr.mxu0 0.0
  %171 = vmatpush2.msra.mxu0 0.0
  %172 = vmatprep.subr.mxu0 0.0
  %173 = vmatpush2.msra.mxu0 0.0
  %174 = vmatprep.mubr.f32.mxu0 0.0
  %175 = vmatmul.mubr.f32.gmra.mxu0 %v63
  %v176 = vpop.f32.mrf.mxu0
  %v177 = vadd.f32 %v49, %v176
  %v178 = vpop.f32.mrf.mxu0
  %v179 = vadd.f32 %v53, %v178
  %180 = vmatprep.mubr.f32.mxu0 0.0
  %181 = vmatmul.mubr.f32.gmra.mxu0 %v66
  %v182 = vpop.f32.mrf.mxu0
  %v183 = vadd.f32 %v49, %v182
  %v184 = vpop.f32.mrf.mxu0
  %v185 = vadd.f32 %v53, %v184
  %186 = vmatprep.mubr.f32.mxu0 0.0
  %187 = vmatmul.mubr.f32.gmra.mxu0 %v69
  %v188 = vpop.f32.mrf.mxu0
  %v189 = vadd.f32 %v49, %v188
  %v190 = vpop.f32.mrf.mxu0
  %v191 = vadd.f32 %v53, %v190
  %192 = vmatprep.mubr.f32.mxu0 0.0
  %193 = vmatmul.mubr.f32.gmra.mxu0 %v72
  %v194 = vpop.f32.mrf.mxu0
  %v195 = vadd.f32 %v49, %v194
  %v196 = vpop.f32.mrf.mxu0
  %v197 = vadd.f32 %v53, %v196
  %198 = vmatprep.mubr.f32.mxu0 0.0
  %199 = vmatmul.mubr.f32.gmra.mxu0 %v75
  %v200 = vpop.f32.mrf.mxu0
  %v201 = vadd.f32 %v49, %v200
  %v202 = vpop.f32.mrf.mxu0
  %v203 = vadd.f32 %v53, %v202
  %204 = vmatprep.mubr.f32.mxu0 0.0
  %205 = vmatmul.mubr.f32.gmra.mxu0 %v78
  %v206 = vpop.f32.mrf.mxu0
  %v207 = vadd.f32 %v49, %v206
  %v208 = vpop.f32.mrf.mxu0
  %v209 = vadd.f32 %v53, %v208
  %210 = vmatprep.mubr.f32.mxu0 0.0
  %211 = vmatmul.mubr.f32.gmra.mxu0 %v81
  %v212 = vpop.f32.mrf.mxu0
  %v213 = vadd.f32 %v49, %v212
  %v214 = vpop.f32.mrf.mxu0
  %v215 = vadd.f32 %v53, %v214
  %216 = vmatprep.mubr.f32.mxu0 0.0
  %217 = vmatmul.mubr.f32.gmra.mxu0 %v84
  %v218 = vpop.f32.mrf.mxu0
  %v219 = vadd.f32 %v49, %v218
  %v220 = vpop.f32.mrf.mxu0
  %v221 = vadd.f32 %v53, %v220
  %222 = vmatprep.mubr.f32.mxu0 0.0
  %223 = vmatmul.mubr.f32.gmra.mxu0 %v87
  %v224 = vpop.f32.mrf.mxu0
  %v225 = vadd.f32 %v49, %v224
  %v226 = vpop.f32.mrf.mxu0
  %v227 = vadd.f32 %v53, %v226
  %228 = vmatprep.mubr.f32.mxu0 0.0
  %229 = vmatmul.mubr.f32.gmra.mxu0 %v90
  %v230 = vpop.f32.mrf.mxu0
  %v231 = vadd.f32 %v49, %v230
  %v232 = vpop.f32.mrf.mxu0
  %v233 = vadd.f32 %v53, %v232
  %234 = vmatprep.mubr.f32.mxu0 0.0
  %235 = vmatmul.mubr.f32.gmra.mxu0 %v93
  %v236 = vpop.f32.mrf.mxu0
  %v237 = vadd.f32 %v49, %v236
  %v238 = vpop.f32.mrf.mxu0
  %v239 = vadd.f32 %v53, %v238
  %240 = vmatprep.mubr.f32.mxu0 0.0
  %241 = vmatmul.mubr.f32.gmra.mxu0 %v96
  %v242 = vpop.f32.mrf.mxu0
  %v243 = vadd.f32 %v49, %v242
  %v244 = vpop.f32.mrf.mxu0
  %v245 = vadd.f32 %v53, %v244
  %246 = vmatprep.mubr.f32.mxu0 0.0
  %247 = vmatmul.mubr.f32.gmra.mxu0 %v99
  %v248 = vpop.f32.mrf.mxu0
  %v249 = vadd.f32 %v49, %v248
  %v250 = vpop.f32.mrf.mxu0
  %v251 = vadd.f32 %v53, %v250
  %252 = vmatprep.mubr.f32.mxu0 0.0
  %253 = vmatmul.mubr.f32.gmra.mxu0 %v102
  %v254 = vpop.f32.mrf.mxu0
  %v255 = vadd.f32 %v49, %v254
  %v256 = vpop.f32.mrf.mxu0
  %v257 = vadd.f32 %v53, %v256
  %258 = vmatprep.mubr.f32.mxu0 0.0
  %259 = vmatmul.mubr.f32.gmra.mxu0 %v105
  %v260 = vpop.f32.mrf.mxu0
  %v261 = vadd.f32 %v49, %v260
  %v262 = vpop.f32.mrf.mxu0
  %v263 = vadd.f32 %v53, %v262
  %264 = vmatprep.mubr.f32.mxu0 0.0
  %265 = vmatmul.mubr.f32.gmra.mxu0 %v108
  %v266 = vpop.f32.mrf.mxu0
  %v267 = vadd.f32 %v49, %v266
  %v268 = vpop.f32.mrf.mxu0
  %v269 = vadd.f32 %v53, %v268
  %270 = vdwg.mxu0
  %271 = vmatprep.subr.mxu0 0.0
  %272 = vmatpush1.msra.mxu0 0.0
  %273 = vmatprep.subr.mxu0 0.0
  %274 = vmatpush1.msra.mxu0 0.0
  %275 = vmatprep.subr.mxu0 0.0
  %276 = vmatpush1.msra.mxu0 0.0
  %277 = vmatprep.subr.mxu0 0.0
  %278 = vmatpush1.msra.mxu0 0.0
  %279 = vmatprep.subr.mxu0 0.0
  %280 = vmatpush1.msra.mxu0 0.0
  %281 = vmatprep.subr.mxu0 0.0
  %282 = vmatpush1.msra.mxu0 0.0
  %283 = vmatprep.subr.mxu0 0.0
  %284 = vmatpush1.msra.mxu0 0.0
  %285 = vmatprep.subr.mxu0 0.0
  %286 = vmatpush1.msra.mxu0 0.0
  %287 = vmatprep.subr.mxu0 0.0
  %288 = vmatpush1.msra.mxu0 0.0
  %289 = vmatprep.subr.mxu0 0.0
  %290 = vmatpush1.msra.mxu0 0.0
  %291 = vmatprep.subr.mxu0 0.0
  %292 = vmatpush1.msra.mxu0 0.0
  %293 = vmatprep.subr.mxu0 0.0
  %294 = vmatpush1.msra.mxu0 0.0
  %295 = vmatprep.subr.mxu0 0.0
  %296 = vmatpush1.msra.mxu0 %v43
  %297 = vmatprep.subr.mxu0 0.0
  %298 = vmatpush1.msra.mxu0 %v40
  %299 = vmatprep.subr.mxu0 0.0
  %300 = vmatpush1.msra.mxu0 %v37
  %301 = vmatprep.subr.mxu0 0.0
  %302 = vmatpush1.msra.mxu0 %v34
  %303 = vmatprep.subr.mxu0 0.0
  %304 = vmatpush2.msra.mxu0 0.0
  %305 = vmatprep.subr.mxu0 0.0
  %306 = vmatpush2.msra.mxu0 0.0
  %307 = vmatprep.subr.mxu0 0.0
  %308 = vmatpush2.msra.mxu0 0.0
  %309 = vmatprep.subr.mxu0 0.0
  %310 = vmatpush2.msra.mxu0 0.0
  %311 = vmatprep.subr.mxu0 0.0
  %312 = vmatpush2.msra.mxu0 0.0
  %313 = vmatprep.subr.mxu0 0.0
  %314 = vmatpush2.msra.mxu0 0.0
  %315 = vmatprep.subr.mxu0 0.0
  %316 = vmatpush2.msra.mxu0 0.0
  %317 = vmatprep.subr.mxu0 0.0
  %318 = vmatpush2.msra.mxu0 0.0
  %319 = vmatprep.subr.mxu0 0.0
  %320 = vmatpush2.msra.mxu0 0.0
  %321 = vmatprep.subr.mxu0 0.0
  %322 = vmatpush2.msra.mxu0 0.0
  %323 = vmatprep.subr.mxu0 0.0
  %324 = vmatpush2.msra.mxu0 0.0
  %325 = vmatprep.subr.mxu0 0.0
  %326 = vmatpush2.msra.mxu0 0.0
  %327 = vmatprep.subr.mxu0 0.0
  %328 = vmatpush2.msra.mxu0 0.0
  %329 = vmatprep.subr.mxu0 0.0
  %330 = vmatpush2.msra.mxu0 0.0
  %331 = vmatprep.subr.mxu0 0.0
  %332 = vmatpush2.msra.mxu0 0.0
  %333 = vmatprep.subr.mxu0 0.0
  %334 = vmatpush2.msra.mxu0 0.0
  %335 = vmatprep.mubr.f32.mxu0 0.0
  %336 = vmatmul.mubr.f32.gmra.mxu0 %v63
  %v337 = vpop.f32.mrf.mxu0
  %v338 = vadd.f32 %v57, %v337
  %v339 = vpop.f32.mrf.mxu0
  %340 = vmatprep.mubr.f32.mxu0 0.0
  %341 = vmatmul.mubr.f32.gmra.mxu0 %v66
  %v342 = vpop.f32.mrf.mxu0
  %v343 = vadd.f32 %v57, %v342
  %v344 = vpop.f32.mrf.mxu0
  %345 = vmatprep.mubr.f32.mxu0 0.0
  %346 = vmatmul.mubr.f32.gmra.mxu0 %v69
  %v347 = vpop.f32.mrf.mxu0
  %v348 = vadd.f32 %v57, %v347
  %v349 = vpop.f32.mrf.mxu0
  %350 = vmatprep.mubr.f32.mxu0 0.0
  %351 = vmatmul.mubr.f32.gmra.mxu0 %v72
  %v352 = vpop.f32.mrf.mxu0
  %v353 = vadd.f32 %v57, %v352
  %v354 = vpop.f32.mrf.mxu0
  %355 = vmatprep.mubr.f32.mxu0 0.0
  %356 = vmatmul.mubr.f32.gmra.mxu0 %v75
  %v357 = vpop.f32.mrf.mxu0
  %v358 = vadd.f32 %v57, %v357
  %v359 = vpop.f32.mrf.mxu0
  %360 = vmatprep.mubr.f32.mxu0 0.0
  %361 = vmatmul.mubr.f32.gmra.mxu0 %v78
  %v362 = vpop.f32.mrf.mxu0
  %v363 = vadd.f32 %v57, %v362
  %v364 = vpop.f32.mrf.mxu0
  %365 = vmatprep.mubr.f32.mxu0 0.0
  %366 = vmatmul.mubr.f32.gmra.mxu0 %v81
  %v367 = vpop.f32.mrf.mxu0
  %v368 = vadd.f32 %v57, %v367
  %v369 = vpop.f32.mrf.mxu0
  %370 = vmatprep.mubr.f32.mxu0 0.0
  %371 = vmatmul.mubr.f32.gmra.mxu0 %v84
  %v372 = vpop.f32.mrf.mxu0
  %v373 = vadd.f32 %v57, %v372
  %v374 = vpop.f32.mrf.mxu0
  %375 = vmatprep.mubr.f32.mxu0 0.0
  %376 = vmatmul.mubr.f32.gmra.mxu0 %v87
  %v377 = vpop.f32.mrf.mxu0
  %v378 = vadd.f32 %v57, %v377
  %v379 = vpop.f32.mrf.mxu0
  %380 = vmatprep.mubr.f32.mxu0 0.0
  %381 = vmatmul.mubr.f32.gmra.mxu0 %v90
  %v382 = vpop.f32.mrf.mxu0
  %v383 = vadd.f32 %v57, %v382
  %v384 = vpop.f32.mrf.mxu0
  %385 = vmatprep.mubr.f32.mxu0 0.0
  %386 = vmatmul.mubr.f32.gmra.mxu0 %v93
  %v387 = vpop.f32.mrf.mxu0
  %v388 = vadd.f32 %v57, %v387
  %v389 = vpop.f32.mrf.mxu0
  %390 = vmatprep.mubr.f32.mxu0 0.0
  %391 = vmatmul.mubr.f32.gmra.mxu0 %v96
  %v392 = vpop.f32.mrf.mxu0
  %v393 = vadd.f32 %v57, %v392
  %v394 = vpop.f32.mrf.mxu0
  %395 = vmatprep.mubr.f32.mxu0 0.0
  %396 = vmatmul.mubr.f32.gmra.mxu0 %v99
  %v397 = vpop.f32.mrf.mxu0
  %v398 = vadd.f32 %v57, %v397
  %v399 = vpop.f32.mrf.mxu0
  %400 = vmatprep.mubr.f32.mxu0 0.0
  %401 = vmatmul.mubr.f32.gmra.mxu0 %v102
  %v402 = vpop.f32.mrf.mxu0
  %v403 = vadd.f32 %v57, %v402
  %v404 = vpop.f32.mrf.mxu0
  %405 = vmatprep.mubr.f32.mxu0 0.0
  %406 = vmatmul.mubr.f32.gmra.mxu0 %v105
  %v407 = vpop.f32.mrf.mxu0
  %v408 = vadd.f32 %v57, %v407
  %v409 = vpop.f32.mrf.mxu0
  %410 = vmatprep.mubr.f32.mxu0 0.0
  %411 = vmatmul.mubr.f32.gmra.mxu0 %v108
  %v412 = vpop.f32.mrf.mxu0
  %v413 = vadd.f32 %v57, %v412
  %v414 = vpop.f32.mrf.mxu0
  %415 = vdwg.mxu0
  %416 = vmatprep.subr.mxu0 0.0
  %417 = vmatpush1.xpose.msra.mxu0 %v269
  %418 = vmatprep.subr.mxu0 0.0
  %419 = vmatpush1.xpose.msra.mxu0 %v263
  %420 = vmatprep.subr.mxu0 0.0
  %421 = vmatpush1.xpose.msra.mxu0 %v257
  %422 = vmatprep.subr.mxu0 0.0
  %423 = vmatpush1.xpose.msra.mxu0 %v251
  %424 = vmatprep.subr.mxu0 0.0
  %425 = vmatpush1.xpose.msra.mxu0 %v245
  %426 = vmatprep.subr.mxu0 0.0
  %427 = vmatpush1.xpose.msra.mxu0 %v239
  %428 = vmatprep.subr.mxu0 0.0
  %429 = vmatpush1.xpose.msra.mxu0 %v233
  %430 = vmatprep.subr.mxu0 0.0
  %431 = vmatpush1.xpose.msra.mxu0 %v227
  %432 = vmatprep.subr.mxu0 0.0
  %433 = vmatpush1.xpose.msra.mxu0 %v221
  %434 = vmatprep.subr.mxu0 0.0
  %435 = vmatpush1.xpose.msra.mxu0 %v215
  %436 = vmatprep.subr.mxu0 0.0
  %437 = vmatpush1.xpose.msra.mxu0 %v209
  %438 = vmatprep.subr.mxu0 0.0
  %439 = vmatpush1.xpose.msra.mxu0 %v203
  %440 = vmatprep.subr.mxu0 0.0
  %441 = vmatpush1.xpose.msra.mxu0 %v197
  %442 = vmatprep.subr.mxu0 0.0
  %443 = vmatpush1.xpose.msra.mxu0 %v191
  %444 = vmatprep.subr.mxu0 0.0
  %445 = vmatpush1.xpose.msra.mxu0 %v185
  %446 = vmatprep.subr.mxu0 0.0
  %447 = vmatpush1.xpose.msra.mxu0 %v179
  %448 = vmatprep.subr.mxu0 0.0
  %449 = vmatpush2.xpose.msra.mxu0 0.0
  %450 = vmatprep.subr.mxu0 0.0
  %451 = vmatpush2.xpose.msra.mxu0 0.0
  %452 = vmatprep.subr.mxu0 0.0
  %453 = vmatpush2.xpose.msra.mxu0 0.0
  %454 = vmatprep.subr.mxu0 0.0
  %455 = vmatpush2.xpose.msra.mxu0 0.0
  %456 = vmatprep.subr.mxu0 0.0
  %457 = vmatpush2.xpose.msra.mxu0 0.0
  %458 = vmatprep.subr.mxu0 0.0
  %459 = vmatpush2.xpose.msra.mxu0 0.0
  %460 = vmatprep.subr.mxu0 0.0
  %461 = vmatpush2.xpose.msra.mxu0 0.0
  %462 = vmatprep.subr.mxu0 0.0
  %463 = vmatpush2.xpose.msra.mxu0 0.0
  %464 = vmatprep.subr.mxu0 0.0
  %465 = vmatpush2.xpose.msra.mxu0 0.0
  %466 = vmatprep.subr.mxu0 0.0
  %467 = vmatpush2.xpose.msra.mxu0 0.0
  %468 = vmatprep.subr.mxu0 0.0
  %469 = vmatpush2.xpose.msra.mxu0 0.0
  %470 = vmatprep.subr.mxu0 0.0
  %471 = vmatpush2.xpose.msra.mxu0 0.0
  %472 = vmatprep.subr.mxu0 0.0
  %473 = vmatpush2.xpose.msra.mxu0 0.0
  %474 = vmatprep.subr.mxu0 0.0
  %475 = vmatpush2.xpose.msra.mxu0 0.0
  %476 = vmatprep.subr.mxu0 0.0
  %477 = vmatpush2.xpose.msra.mxu0 0.0
  %478 = vmatprep.subr.mxu0 0.0
  %479 = vmatpush2.xpose.msra.mxu0 0.0
  %480 = vmatprep.mubr.f32.mxu0 0.0
  %481 = vmatmul.mubr.f32.gmra.mxu0 %v338
  %v482 = vpop.f32.mrf.mxu0
  %v483 = vadd.f32 0.0, %v482
  %v484 = vpop.f32.mrf.mxu0
  %485 = vmatprep.mubr.f32.mxu0 0.0
  %486 = vmatmul.mubr.f32.gmra.mxu0 %v343
  %v487 = vpop.f32.mrf.mxu0
  %v488 = vadd.f32 0.0, %v487
  %v489 = vpop.f32.mrf.mxu0
  %490 = vmatprep.mubr.f32.mxu0 0.0
  %491 = vmatmul.mubr.f32.gmra.mxu0 %v348
  %v492 = vpop.f32.mrf.mxu0
  %v493 = vadd.f32 0.0, %v492
  %v494 = vpop.f32.mrf.mxu0
  %495 = vmatprep.mubr.f32.mxu0 0.0
  %496 = vmatmul.mubr.f32.gmra.mxu0 %v353
  %v497 = vpop.f32.mrf.mxu0
  %v498 = vadd.f32 0.0, %v497
  %v499 = vpop.f32.mrf.mxu0
  %500 = vmatprep.mubr.f32.mxu0 0.0
  %501 = vmatmul.mubr.f32.gmra.mxu0 %v358
  %v502 = vpop.f32.mrf.mxu0
  %v503 = vadd.f32 0.0, %v502
  %v504 = vpop.f32.mrf.mxu0
  %505 = vmatprep.mubr.f32.mxu0 0.0
  %506 = vmatmul.mubr.f32.gmra.mxu0 %v363
  %v507 = vpop.f32.mrf.mxu0
  %v508 = vadd.f32 0.0, %v507
  %v509 = vpop.f32.mrf.mxu0
  %510 = vmatprep.mubr.f32.mxu0 0.0
  %511 = vmatmul.mubr.f32.gmra.mxu0 %v368
  %v512 = vpop.f32.mrf.mxu0
  %v513 = vadd.f32 0.0, %v512
  %v514 = vpop.f32.mrf.mxu0
  %515 = vmatprep.mubr.f32.mxu0 0.0
  %516 = vmatmul.mubr.f32.gmra.mxu0 %v373
  %v517 = vpop.f32.mrf.mxu0
  %v518 = vadd.f32 0.0, %v517
  %v519 = vpop.f32.mrf.mxu0
  %520 = vmatprep.mubr.f32.mxu0 0.0
  %521 = vmatmul.mubr.f32.gmra.mxu0 %v378
  %v522 = vpop.f32.mrf.mxu0
  %v523 = vadd.f32 0.0, %v522
  %v524 = vpop.f32.mrf.mxu0
  %525 = vmatprep.mubr.f32.mxu0 0.0
  %526 = vmatmul.mubr.f32.gmra.mxu0 %v383
  %v527 = vpop.f32.mrf.mxu0
  %v528 = vadd.f32 0.0, %v527
  %v529 = vpop.f32.mrf.mxu0
  %530 = vmatprep.mubr.f32.mxu0 0.0
  %531 = vmatmul.mubr.f32.gmra.mxu0 %v388
  %v532 = vpop.f32.mrf.mxu0
  %v533 = vadd.f32 0.0, %v532
  %v534 = vpop.f32.mrf.mxu0
  %535 = vmatprep.mubr.f32.mxu0 0.0
  %536 = vmatmul.mubr.f32.gmra.mxu0 %v393
  %v537 = vpop.f32.mrf.mxu0
  %v538 = vadd.f32 0.0, %v537
  %v539 = vpop.f32.mrf.mxu0
  %540 = vmatprep.mubr.f32.mxu0 0.0
  %541 = vmatmul.mubr.f32.gmra.mxu0 %v398
  %v542 = vpop.f32.mrf.mxu0
  %v543 = vadd.f32 0.0, %v542
  %v544 = vpop.f32.mrf.mxu0
  %545 = vmatprep.mubr.f32.mxu0 0.0
  %546 = vmatmul.mubr.f32.gmra.mxu0 %v403
  %v547 = vpop.f32.mrf.mxu0
  %v548 = vadd.f32 0.0, %v547
  %v549 = vpop.f32.mrf.mxu0
  %550 = vmatprep.mubr.f32.mxu0 0.0
  %551 = vmatmul.mubr.f32.gmra.mxu0 %v408
  %v552 = vpop.f32.mrf.mxu0
  %v553 = vadd.f32 0.0, %v552
  %v554 = vpop.f32.mrf.mxu0
  %555 = vmatprep.mubr.f32.mxu0 0.0
  %556 = vmatmul.mubr.f32.gmra.mxu0 %v413
  %v557 = vpop.f32.mrf.mxu0
  %v558 = vadd.f32 0.0, %v557
  %v559 = vpop.f32.mrf.mxu0
  %560 = vdwg.mxu0
  %v561 = vlaneseq
  %v562 = vand.u32 %v561, 127
  %vm563 = vcmp.lt.s32.totalorder %v562, 8
  %v564 = vsel %vm563, %v483, -1e+30
  %v565 = vsel %vm563, %v488, -1e+30
  %v566 = vsel %vm563, %v493, -1e+30
  %v567 = vsel %vm563, %v498, -1e+30
  %v568 = vsel %vm563, %v503, -1e+30
  %v569 = vsel %vm563, %v508, -1e+30
  %v570 = vsel %vm563, %v513, -1e+30
  %v571 = vsel %vm563, %v518, -1e+30
  %v572 = vsel %vm563, %v523, -1e+30
  %v573 = vsel %vm563, %v528, -1e+30
  %v574 = vsel %vm563, %v533, -1e+30
  %v575 = vsel %vm563, %v538, -1e+30
  %v576 = vsel %vm563, %v543, -1e+30
  %v577 = vsel %vm563, %v548, -1e+30
  %v578 = vsel %vm563, %v553, -1e+30
  %v579 = vsel %vm563, %v558, -1e+30
  %580 = vmax.xlane.f32.xlu0 %v564
  %v581 = vpop.xlane.xlu0 %580
  %582 = vmax.xlane.f32.xlu0 %v565
  %v583 = vpop.xlane.xlu0 %582
  %584 = vmax.xlane.f32.xlu0 %v566
  %v585 = vpop.xlane.xlu0 %584
  %586 = vmax.xlane.f32.xlu0 %v567
  %v587 = vpop.xlane.xlu0 %586
  %588 = vmax.xlane.f32.xlu0 %v568
  %v589 = vpop.xlane.xlu0 %588
  %590 = vmax.xlane.f32.xlu0 %v569
  %v591 = vpop.xlane.xlu0 %590
  %592 = vmax.xlane.f32.xlu0 %v570
  %v593 = vpop.xlane.xlu0 %592
  %594 = vmax.xlane.f32.xlu0 %v571
  %v595 = vpop.xlane.xlu0 %594
  %596 = vmax.xlane.f32.xlu0 %v572
  %v597 = vpop.xlane.xlu0 %596
  %598 = vmax.xlane.f32.xlu0 %v573
  %v599 = vpop.xlane.xlu0 %598
  %600 = vmax.xlane.f32.xlu0 %v574
  %v601 = vpop.xlane.xlu0 %600
  %602 = vmax.xlane.f32.xlu0 %v575
  %v603 = vpop.xlane.xlu0 %602
  %604 = vmax.xlane.f32.xlu0 %v576
  %v605 = vpop.xlane.xlu0 %604
  %606 = vmax.xlane.f32.xlu0 %v577
  %v607 = vpop.xlane.xlu0 %606
  %608 = vmax.xlane.f32.xlu0 %v578
  %v609 = vpop.xlane.xlu0 %608
  %610 = vmax.xlane.f32.xlu0 %v579
  %v611 = vpop.xlane.xlu0 %610
  %v612 = vsub.f32 %v564, %v581
  %v613 = vsub.f32 %v565, %v583
  %v614 = vsub.f32 %v566, %v585
  %v615 = vsub.f32 %v567, %v587
  %v616 = vsub.f32 %v568, %v589
  %v617 = vsub.f32 %v569, %v591
  %v618 = vsub.f32 %v570, %v593
  %v619 = vsub.f32 %v571, %v595
  %v620 = vsub.f32 %v572, %v597
  %v621 = vsub.f32 %v573, %v599
  %v622 = vsub.f32 %v574, %v601
  %v623 = vsub.f32 %v575, %v603
  %v624 = vsub.f32 %v576, %v605
  %v625 = vsub.f32 %v577, %v607
  %v626 = vsub.f32 %v578, %v609
  %v627 = vsub.f32 %v579, %v611
  %v628 = vmul.f32 %v612, 1.442695
  %v629 = vpow.pop %v628
  %v630 = vmul.f32 %v613, 1.442695
  %v631 = vpow.pop %v630
  %v632 = vmul.f32 %v614, 1.442695
  %v633 = vpow.pop %v632
  %v634 = vmul.f32 %v615, 1.442695
  %v635 = vpow.pop %v634
  %v636 = vmul.f32 %v616, 1.442695
  %v637 = vpow.pop %v636
  %v638 = vmul.f32 %v617, 1.442695
  %v639 = vpow.pop %v638
  %v640 = vmul.f32 %v618, 1.442695
  %v641 = vpow.pop %v640
  %v642 = vmul.f32 %v619, 1.442695
  %v643 = vpow.pop %v642
  %v644 = vmul.f32 %v620, 1.442695
  %v645 = vpow.pop %v644
  %v646 = vmul.f32 %v621, 1.442695
  %v647 = vpow.pop %v646
  %v648 = vmul.f32 %v622, 1.442695
  %v649 = vpow.pop %v648
  %v650 = vmul.f32 %v623, 1.442695
  %v651 = vpow.pop %v650
  %v652 = vmul.f32 %v624, 1.442695
  %v653 = vpow.pop %v652
  %v654 = vmul.f32 %v625, 1.442695
  %v655 = vpow.pop %v654
  %v656 = vmul.f32 %v626, 1.442695
  %v657 = vpow.pop %v656
  %v658 = vmul.f32 %v627, 1.442695
  %v659 = vpow.pop %v658
  %660 = vadd.xlane.f32.xlu0 %v629
  %v661 = vpop.xlane.xlu0 %660
  %662 = vadd.xlane.f32.xlu0 %v631
  %v663 = vpop.xlane.xlu0 %662
  %664 = vadd.xlane.f32.xlu0 %v633
  %v665 = vpop.xlane.xlu0 %664
  %666 = vadd.xlane.f32.xlu0 %v635
  %v667 = vpop.xlane.xlu0 %666
  %668 = vadd.xlane.f32.xlu0 %v637
  %v669 = vpop.xlane.xlu0 %668
  %670 = vadd.xlane.f32.xlu0 %v639
  %v671 = vpop.xlane.xlu0 %670
  %672 = vadd.xlane.f32.xlu0 %v641
  %v673 = vpop.xlane.xlu0 %672
  %674 = vadd.xlane.f32.xlu0 %v643
  %v675 = vpop.xlane.xlu0 %674
  %676 = vadd.xlane.f32.xlu0 %v645
  %v677 = vpop.xlane.xlu0 %676
  %678 = vadd.xlane.f32.xlu0 %v647
  %v679 = vpop.xlane.xlu0 %678
  %680 = vadd.xlane.f32.xlu0 %v649
  %v681 = vpop.xlane.xlu0 %680
  %682 = vadd.xlane.f32.xlu0 %v651
  %v683 = vpop.xlane.xlu0 %682
  %684 = vadd.xlane.f32.xlu0 %v653
  %v685 = vpop.xlane.xlu0 %684
  %686 = vadd.xlane.f32.xlu0 %v655
  %v687 = vpop.xlane.xlu0 %686
  %688 = vadd.xlane.f32.xlu0 %v657
  %v689 = vpop.xlane.xlu0 %688
  %690 = vadd.xlane.f32.xlu0 %v659
  %v691 = vpop.xlane.xlu0 %690
  %v692 = vrcp.pop %v661
  %v693 = vrcp.pop %v663
  %v694 = vrcp.pop %v665
  %v695 = vrcp.pop %v667
  %v696 = vrcp.pop %v669
  %v697 = vrcp.pop %v671
  %v698 = vrcp.pop %v673
  %v699 = vrcp.pop %v675
  %v700 = vrcp.pop %v677
  %v701 = vrcp.pop %v679
  %v702 = vrcp.pop %v681
  %v703 = vrcp.pop %v683
  %v704 = vrcp.pop %v685
  %v705 = vrcp.pop %v687
  %v706 = vrcp.pop %v689
  %v707 = vrcp.pop %v691
  %v708 = vmul.f32 %v661, %v692
  %v709 = vmul.f32 %v663, %v693
  %v710 = vmul.f32 %v665, %v694
  %v711 = vmul.f32 %v667, %v695
  %v712 = vmul.f32 %v669, %v696
  %v713 = vmul.f32 %v671, %v697
  %v714 = vmul.f32 %v673, %v698
  %v715 = vmul.f32 %v675, %v699
  %v716 = vmul.f32 %v677, %v700
  %v717 = vmul.f32 %v679, %v701
  %v718 = vmul.f32 %v681, %v702
  %v719 = vmul.f32 %v683, %v703
  %v720 = vmul.f32 %v685, %v704
  %v721 = vmul.f32 %v687, %v705
  %v722 = vmul.f32 %v689, %v706
  %v723 = vmul.f32 %v691, %v707
  %v724 = vsub.f32 2.0, %v708
  %v725 = vsub.f32 2.0, %v709
  %v726 = vsub.f32 2.0, %v710
  %v727 = vsub.f32 2.0, %v711
  %v728 = vsub.f32 2.0, %v712
  %v729 = vsub.f32 2.0, %v713
  %v730 = vsub.f32 2.0, %v714
  %v731 = vsub.f32 2.0, %v715
  %v732 = vsub.f32 2.0, %v716
  %v733 = vsub.f32 2.0, %v717
  %v734 = vsub.f32 2.0, %v718
  %v735 = vsub.f32 2.0, %v719
  %v736 = vsub.f32 2.0, %v720
  %v737 = vsub.f32 2.0, %v721
  %v738 = vsub.f32 2.0, %v722
  %v739 = vsub.f32 2.0, %v723
  %v740 = vmul.f32 %v692, %v724
  %v741 = vmul.f32 %v693, %v725
  %v742 = vmul.f32 %v694, %v726
  %v743 = vmul.f32 %v695, %v727
  %v744 = vmul.f32 %v696, %v728
  %v745 = vmul.f32 %v697, %v729
  %v746 = vmul.f32 %v698, %v730
  %v747 = vmul.f32 %v699, %v731
  %v748 = vmul.f32 %v700, %v732
  %v749 = vmul.f32 %v701, %v733
  %v750 = vmul.f32 %v702, %v734
  %v751 = vmul.f32 %v703, %v735
  %v752 = vmul.f32 %v704, %v736
  %v753 = vmul.f32 %v705, %v737
  %v754 = vmul.f32 %v706, %v738
  %v755 = vmul.f32 %v707, %v739
  %v756 = vmul.f32 %v629, %v740
  %v757 = vmul.f32 %v631, %v741
  %v758 = vmul.f32 %v633, %v742
  %v759 = vmul.f32 %v635, %v743
  %v760 = vmul.f32 %v637, %v744
  %v761 = vmul.f32 %v639, %v745
  %v762 = vmul.f32 %v641, %v746
  %v763 = vmul.f32 %v643, %v747
  %v764 = vmul.f32 %v645, %v748
  %v765 = vmul.f32 %v647, %v749
  %v766 = vmul.f32 %v649, %v750
  %v767 = vmul.f32 %v651, %v751
  %v768 = vmul.f32 %v653, %v752
  %v769 = vmul.f32 %v655, %v753
  %v770 = vmul.f32 %v657, %v754
  %v771 = vmul.f32 %v659, %v755
  %772 = vmatprep.subr.mxu0 0.0
  %773 = vmatpush1.msra.mxu0 %v267
  %774 = vmatprep.subr.mxu0 0.0
  %775 = vmatpush1.msra.mxu0 %v261
  %776 = vmatprep.subr.mxu0 0.0
  %777 = vmatpush1.msra.mxu0 %v255
  %778 = vmatprep.subr.mxu0 0.0
  %779 = vmatpush1.msra.mxu0 %v249
  %780 = vmatprep.subr.mxu0 0.0
  %781 = vmatpush1.msra.mxu0 %v243
  %782 = vmatprep.subr.mxu0 0.0
  %783 = vmatpush1.msra.mxu0 %v237
  %784 = vmatprep.subr.mxu0 0.0
  %785 = vmatpush1.msra.mxu0 %v231
  %786 = vmatprep.subr.mxu0 0.0
  %787 = vmatpush1.msra.mxu0 %v225
  %788 = vmatprep.subr.mxu0 0.0
  %789 = vmatpush1.msra.mxu0 %v219
  %790 = vmatprep.subr.mxu0 0.0
  %791 = vmatpush1.msra.mxu0 %v213
  %792 = vmatprep.subr.mxu0 0.0
  %793 = vmatpush1.msra.mxu0 %v207
  %794 = vmatprep.subr.mxu0 0.0
  %795 = vmatpush1.msra.mxu0 %v201
  %796 = vmatprep.subr.mxu0 0.0
  %797 = vmatpush1.msra.mxu0 %v195
  %798 = vmatprep.subr.mxu0 0.0
  %799 = vmatpush1.msra.mxu0 %v189
  %800 = vmatprep.subr.mxu0 0.0
  %801 = vmatpush1.msra.mxu0 %v183
  %802 = vmatprep.subr.mxu0 0.0
  %803 = vmatpush1.msra.mxu0 %v177
  %804 = vmatprep.subr.mxu0 0.0
  %805 = vmatpush2.msra.mxu0 0.0
  %806 = vmatprep.subr.mxu0 0.0
  %807 = vmatpush2.msra.mxu0 0.0
  %808 = vmatprep.subr.mxu0 0.0
  %809 = vmatpush2.msra.mxu0 0.0
  %810 = vmatprep.subr.mxu0 0.0
  %811 = vmatpush2.msra.mxu0 0.0
  %812 = vmatprep.subr.mxu0 0.0
  %813 = vmatpush2.msra.mxu0 0.0
  %814 = vmatprep.subr.mxu0 0.0
  %815 = vmatpush2.msra.mxu0 0.0
  %816 = vmatprep.subr.mxu0 0.0
  %817 = vmatpush2.msra.mxu0 0.0
  %818 = vmatprep.subr.mxu0 0.0
  %819 = vmatpush2.msra.mxu0 0.0
  %820 = vmatprep.subr.mxu0 0.0
  %821 = vmatpush2.msra.mxu0 0.0
  %822 = vmatprep.subr.mxu0 0.0
  %823 = vmatpush2.msra.mxu0 0.0
  %824 = vmatprep.subr.mxu0 0.0
  %825 = vmatpush2.msra.mxu0 0.0
  %826 = vmatprep.subr.mxu0 0.0
  %827 = vmatpush2.msra.mxu0 0.0
  %828 = vmatprep.subr.mxu0 0.0
  %829 = vmatpush2.msra.mxu0 0.0
  %830 = vmatprep.subr.mxu0 0.0
  %831 = vmatpush2.msra.mxu0 0.0
  %832 = vmatprep.subr.mxu0 0.0
  %833 = vmatpush2.msra.mxu0 0.0
  %834 = vmatprep.subr.mxu0 0.0
  %835 = vmatpush2.msra.mxu0 0.0
  %836 = vmatprep.mubr.f32.mxu0 0.0
  %837 = vmatmul.mubr.f32.gmra.mxu0 %v756
  %v838 = vpop.f32.mrf.mxu0
  %v839 = vadd.f32 0.0, %v838
  %v840 = vpop.f32.mrf.mxu0
  %841 = vmatprep.mubr.f32.mxu0 0.0
  %842 = vmatmul.mubr.f32.gmra.mxu0 %v757
  %v843 = vpop.f32.mrf.mxu0
  %v844 = vadd.f32 0.0, %v843
  %v845 = vpop.f32.mrf.mxu0
  %846 = vmatprep.mubr.f32.mxu0 0.0
  %847 = vmatmul.mubr.f32.gmra.mxu0 %v758
  %v848 = vpop.f32.mrf.mxu0
  %v849 = vadd.f32 0.0, %v848
  %v850 = vpop.f32.mrf.mxu0
  %851 = vmatprep.mubr.f32.mxu0 0.0
  %852 = vmatmul.mubr.f32.gmra.mxu0 %v759
  %v853 = vpop.f32.mrf.mxu0
  %v854 = vadd.f32 0.0, %v853
  %v855 = vpop.f32.mrf.mxu0
  %856 = vmatprep.mubr.f32.mxu0 0.0
  %857 = vmatmul.mubr.f32.gmra.mxu0 %v760
  %v858 = vpop.f32.mrf.mxu0
  %v859 = vadd.f32 0.0, %v858
  %v860 = vpop.f32.mrf.mxu0
  %861 = vmatprep.mubr.f32.mxu0 0.0
  %862 = vmatmul.mubr.f32.gmra.mxu0 %v761
  %v863 = vpop.f32.mrf.mxu0
  %v864 = vadd.f32 0.0, %v863
  %v865 = vpop.f32.mrf.mxu0
  %866 = vmatprep.mubr.f32.mxu0 0.0
  %867 = vmatmul.mubr.f32.gmra.mxu0 %v762
  %v868 = vpop.f32.mrf.mxu0
  %v869 = vadd.f32 0.0, %v868
  %v870 = vpop.f32.mrf.mxu0
  %871 = vmatprep.mubr.f32.mxu0 0.0
  %872 = vmatmul.mubr.f32.gmra.mxu0 %v763
  %v873 = vpop.f32.mrf.mxu0
  %v874 = vadd.f32 0.0, %v873
  %v875 = vpop.f32.mrf.mxu0
  %876 = vmatprep.mubr.f32.mxu0 0.0
  %877 = vmatmul.mubr.f32.gmra.mxu0 %v764
  %v878 = vpop.f32.mrf.mxu0
  %v879 = vadd.f32 0.0, %v878
  %v880 = vpop.f32.mrf.mxu0
  %881 = vmatprep.mubr.f32.mxu0 0.0
  %882 = vmatmul.mubr.f32.gmra.mxu0 %v765
  %v883 = vpop.f32.mrf.mxu0
  %v884 = vadd.f32 0.0, %v883
  %v885 = vpop.f32.mrf.mxu0
  %886 = vmatprep.mubr.f32.mxu0 0.0
  %887 = vmatmul.mubr.f32.gmra.mxu0 %v766
  %v888 = vpop.f32.mrf.mxu0
  %v889 = vadd.f32 0.0, %v888
  %v890 = vpop.f32.mrf.mxu0
  %891 = vmatprep.mubr.f32.mxu0 0.0
  %892 = vmatmul.mubr.f32.gmra.mxu0 %v767
  %v893 = vpop.f32.mrf.mxu0
  %v894 = vadd.f32 0.0, %v893
  %v895 = vpop.f32.mrf.mxu0
  %896 = vmatprep.mubr.f32.mxu0 0.0
  %897 = vmatmul.mubr.f32.gmra.mxu0 %v768
  %v898 = vpop.f32.mrf.mxu0
  %v899 = vadd.f32 0.0, %v898
  %v900 = vpop.f32.mrf.mxu0
  %901 = vmatprep.mubr.f32.mxu0 0.0
  %902 = vmatmul.mubr.f32.gmra.mxu0 %v769
  %v903 = vpop.f32.mrf.mxu0
  %v904 = vadd.f32 0.0, %v903
  %v905 = vpop.f32.mrf.mxu0
  %906 = vmatprep.mubr.f32.mxu0 0.0
  %907 = vmatmul.mubr.f32.gmra.mxu0 %v770
  %v908 = vpop.f32.mrf.mxu0
  %v909 = vadd.f32 0.0, %v908
  %v910 = vpop.f32.mrf.mxu0
  %911 = vmatprep.mubr.f32.mxu0 0.0
  %912 = vmatmul.mubr.f32.gmra.mxu0 %v771
  %v913 = vpop.f32.mrf.mxu0
  %v914 = vadd.f32 0.0, %v913
  %v915 = vpop.f32.mrf.mxu0
  %916 = vdwg.mxu0
  %917 = vst [vmem:[%s3] sm:$0xff] %v839
  %918 = vst [vmem:[%s3 + $0x8] sm:$0xff] %v844
  %919 = vst [vmem:[%s3 + $0x10] sm:$0xff] %v849
  %920 = vst [vmem:[%s3 + $0x18] sm:$0xff] %v854
  %921 = vst [vmem:[%s3 + $0x20] sm:$0xff] %v859
  %922 = vst [vmem:[%s3 + $0x28] sm:$0xff] %v864
  %923 = vst [vmem:[%s3 + $0x30] sm:$0xff] %v869
  %924 = vst [vmem:[%s3 + $0x38] sm:$0xff] %v874
  %925 = vst [vmem:[%s3 + $0x40] sm:$0xff] %v879
  %926 = vst [vmem:[%s3 + $0x48] sm:$0xff] %v884
  %927 = vst [vmem:[%s3 + $0x50] sm:$0xff] %v889
  %928 = vst [vmem:[%s3 + $0x58] sm:$0xff] %v894
  %929 = vst [vmem:[%s3 + $0x60] sm:$0xff] %v899
  %930 = vst [vmem:[%s3 + $0x68] sm:$0xff] %v904
  %931 = vst [vmem:[%s3 + $0x70] sm:$0xff] %v909
  %932 = vst [vmem:[%s3 + $0x78] sm:$0xff] %v914
  %933 = vst [vmem:[%s4] sm:$0xff] %v756
  %934 = vst [vmem:[%s4 + $0x8] sm:$0xff] %v757
  %935 = vst [vmem:[%s4 + $0x10] sm:$0xff] %v758
  %936 = vst [vmem:[%s4 + $0x18] sm:$0xff] %v759
  %937 = vst [vmem:[%s4 + $0x20] sm:$0xff] %v760
  %938 = vst [vmem:[%s4 + $0x28] sm:$0xff] %v761
  %939 = vst [vmem:[%s4 + $0x30] sm:$0xff] %v762
  %940 = vst [vmem:[%s4 + $0x38] sm:$0xff] %v763
  %941 = vst [vmem:[%s4 + $0x40] sm:$0xff] %v764
  %942 = vst [vmem:[%s4 + $0x48] sm:$0xff] %v765
  %943 = vst [vmem:[%s4 + $0x50] sm:$0xff] %v766
  %944 = vst [vmem:[%s4 + $0x58] sm:$0xff] %v767
  %945 = vst [vmem:[%s4 + $0x60] sm:$0xff] %v768
  %946 = vst [vmem:[%s4 + $0x68] sm:$0xff] %v769
  %947 = vst [vmem:[%s4 + $0x70] sm:$0xff] %v770
  %948 = vst [vmem:[%s4 + $0x78] sm:$0xff] %v771
  // Predicated region
  $region14: #{attention_forward_batched.1} parent=0 // pred_check
    _
  $region15: #{attention_forward_batched.1} parent=0 // pred_check_branch
    %950 = sbr.rel (0) target = $region17
  $region16: #{attention_forward_batched.1} parent=0 // pred_region
    _
  $region17: #{attention_forward_batched.1} parent=0 // pred_fallthru
    _
  // Predicated region
  $region18: #{attention_forward_batched.1} parent=0 // pred_check
    _
  $region19: #{attention_forward_batched.1} parent=0 // pred_check_branch
    %952 = sbr.rel (0) target = $region21
  $region20: #{attention_forward_batched.1} parent=0 // pred_region
    _
  $region21: #{attention_forward_batched.1} parent=0 // pred_fallthru
    _
  // Predicated region
  $region22: #{attention_forward_batched.1} parent=0 // pred_check
    _
  $region23: #{attention_forward_batched.1} parent=0 // pred_check_branch
    %954 = sbr.rel (0) target = $region25
  $region24: #{attention_forward_batched.1} parent=0 // pred_region
    _
  $region25: #{attention_forward_batched.1} parent=0 // pred_fallthru
    _
  // Predicated region
  $region26: #{attention_forward_batched.1} parent=0 // pred_check
    _
  $region27: #{attention_forward_batched.1} parent=0 // pred_check_branch
    %956 = sbr.rel (0) target = $region29
  $region28: #{attention_forward_batched.1} parent=0 // pred_region
    _
  $region29: #{attention_forward_batched.1} parent=0 // pred_fallthru
    _

</llo_original>
